<compile_context>
chip_gen: v7x
topology: tpu7x:2x2x1
jax: 0.10.0
libtpu: 0.0.40
codegen_flags: <defaults>
</compile_context>

<pallas_src>
import math
import functools
from types import SimpleNamespace

import numpy as np
import jax
import jax.numpy as jnp
from jax import lax
from jax.experimental import pallas as pl
from jax.experimental.pallas import tpu as pltpu

# ------------------------------- configuration -------------------------------
B = 2            # batch
L = 8            # sequence length (events per sequence)
HIDDEN = 64      # hidden_dims == cond_emb_size
EMB_DIM = 64     # emb_dim (== hidden_dims so CNNSeqEmb input_dim matches)
ENCODER_LAYER = 2
KERNEL = 4       # CNN kernel size
NUM_COND = 6     # num_condition_types
STEPS = 20       # diffusion steps
MAX_TIME = 10.0
NHEAD = 4
D_FF = 2048      # PyTorch TransformerEncoderLayer default dim_feedforward
NUM_TF_LAYERS = 3
COND_TOKENS = 200
MAX_POS = 64     # max_position_embeddings (shrunk from 3000 for the small test)
LN_EPS = 1e-5
# Gate for the EUP approximate reciprocal in the attention softmax (perf); set False for
# bit-faithful softmax normalization during validation runs.
SOFTMAX_APPROX_RECIP = True


# --------------------------- diffusion schedule -------------------------------
def betas_for_alpha_bar(num_steps, alpha_bar, max_beta=0.999):
    betas = []
    for i in range(num_steps):
        t1 = i / num_steps
        t2 = (i + 1) / num_steps
        betas.append(min(1 - alpha_bar(t2) / alpha_bar(t1), max_beta))
    return np.asarray(betas, dtype=np.float32)


BETA = betas_for_alpha_bar(STEPS, lambda n: math.cos((n + 0.008) / 1.008 * math.pi / 2) ** 2)
ALPHA = 1.0 - BETA
ALPHA_CUMPROD = np.cumprod(ALPHA).astype(np.float32)


# ------------------------------ Pallas kernels --------------------------------
def _softmax_rows(s):
    """Numerically-stable softmax over the last axis (f32)."""
    s = s - jnp.max(s, axis=-1, keepdims=True)
    p = jnp.exp(s)
    den = jnp.sum(p, axis=-1, keepdims=True)
    if SOFTMAX_APPROX_RECIP:
        return p * pl.reciprocal(den, approx=True)
    return p / den


def _cond_model_kernel(x_ref, pos_ref, up1_w_ref, up1_b_ref, up2_w_ref, up2_b_ref, *refs,
                       num_layers, seq, heads, eps):
    """Fused ConditionEmbeddingModel for ONE batch element (grid over batch):

    input_up_proj (Linear+ReLU+Linear) + position add + `num_layers` post-LN
    TransformerEncoderLayers (eval, no dropout).  Only the last token is written out;
    in the last layer Q / residual / LN1 / FF / LN2 are computed for that row only.
    refs = [12 weight refs per layer ...] + [o_ref].
    """
    o_ref = refs[-1]
    d = pos_ref.shape[-1]
    dh = d // heads

    x = x_ref[0]                                                      # (L, 6*D) f32
    h = jnp.dot(x, up1_w_ref[...], preferred_element_type=jnp.float32) + up1_b_ref[...]
    h = jnp.maximum(h, 0.0)
    h = jnp.dot(h, up2_w_ref[...], preferred_element_type=jnp.float32) + up2_b_ref[...]
    h = h + pos_ref[...]                                              # (L, D)

    for li in range(num_layers):
        (wqkv, bqkv, wo, bo, ln1g, ln1b,
         wff1, bff1, wff2, bff2, ln2g, ln2b) = refs[12 * li:12 * (li + 1)]
        last = (li == num_layers - 1)

        # Fused QKV projection; 1/sqrt(dh) already folded into W_q / b_q at init.
        qkv = jnp.dot(h, wqkv[...], preferred_element_type=jnp.float32) + bqkv[...]  # (L, 3D)
        q, k, v = qkv[:, :d], qkv[:, d:2 * d], qkv[:, 2 * d:]
        if last:
            q = q[seq - 1:seq, :]                                     # only the consumed token

        # Batched attention over heads: one score einsum, one softmax, one AV einsum.
        qb = jnp.concatenate([q[None, :, hh * dh:(hh + 1) * dh] for hh in range(heads)], axis=0)
        kb = jnp.concatenate([k[None, :, hh * dh:(hh + 1) * dh] for hh in range(heads)], axis=0)
        vb = jnp.concatenate([v[None, :, hh * dh:(hh + 1) * dh] for hh in range(heads)], axis=0)
        s = jnp.einsum('hld,hmd->hlm', qb, kb,
                       preferred_element_type=jnp.float32)            # (H, Lq, L)
        p = _softmax_rows(s)
        ob = jnp.einsum('hlm,hmd->hld', p, vb,
                        preferred_element_type=jnp.float32)           # (H, Lq, dh)
        attn = jnp.concatenate([ob[hh] for hh in range(heads)], axis=-1)   # (Lq, D)
        attn = jnp.dot(attn, wo[...], preferred_element_type=jnp.float32) + bo[...]

        # residual + LayerNorm 1 (only the last row in the final layer)
        x_res = h[seq - 1:seq, :] if last else h
        h1 = x_res + attn
        mu = jnp.mean(h1, axis=-1, keepdims=True)
        var = jnp.mean((h1 - mu) ** 2, axis=-1, keepdims=True)
        h1 = (h1 - mu) * lax.rsqrt(var + eps) * ln1g[...] + ln1b[...]

        # feed-forward: bf16 MXU operands, f32 accumulation; intermediate never leaves VMEM.
        f = jnp.dot(h1.astype(jnp.bfloat16), wff1[...],
                    preferred_element_type=jnp.float32) + bff1[...]
        f = jnp.maximum(f, 0.0)
        f = jnp.dot(f.astype(jnp.bfloat16), wff2[...],
                    preferred_element_type=jnp.float32) + bff2[...]

        # residual + LayerNorm 2
        h2 = h1 + f
        mu2 = jnp.mean(h2, axis=-1, keepdims=True)
        var2 = jnp.mean((h2 - mu2) ** 2, axis=-1, keepdims=True)
        h = (h2 - mu2) * lax.rsqrt(var2 + eps) * ln2g[...] + ln2b[...]

    # h is (1, D) after the pruned final layer.
    o_ref[...] = h.astype(o_ref.dtype).reshape(o_ref.shape)


def _full_spec(shape):
    """Full-array block replicated across the batch grid (weights stay resident)."""
    zeros = (0,) * len(shape)
    return pl.BlockSpec(shape, lambda b, _z=zeros: _z)


def condition_embedding_model(p, batch):
    """ConditionEmbeddingModel.forward fused into one kernel; returns the LAST-token
    embedding (B, HIDDEN) -- the only part of the output the AddThin forward consumes."""
    Bb, Ls = batch.condition1_indicator.shape
    embs = [jnp.take(p["tok"], getattr(batch, f"condition{i + 1}_indicator"), axis=0)
            for i in range(NUM_COND)]
    x = jnp.concatenate(embs, axis=-1)                                 # (B, L, 6*D)
    pos = p["pos"][:Ls]                                                # (L, D)

    args = [x, pos, p["up1_w"], p["up1_b"], p["up2_w"], p["up2_b"]]
    in_specs = [
        pl.BlockSpec((1, Ls, NUM_COND * HIDDEN), lambda b: (b, 0, 0)),
        _full_spec(pos.shape),
        _full_spec(p["up1_w"].shape), _full_spec(p["up1_b"].shape),
        _full_spec(p["up2_w"].shape), _full_spec(p["up2_b"].shape),
    ]
    names = ("wqkv", "bqkv", "wo", "bo", "ln1_g", "ln1_b",
             "wff1", "bff1", "wff2", "bff2", "ln2_g", "ln2_b")
    for layer in p["layers"]:
        for name in names:
            a = layer[name]
            args.append(a)
            in_specs.append(_full_spec(a.shape))

    out = pl.pallas_call(
        functools.partial(_cond_model_kernel, num_layers=len(p["layers"]),
                          seq=Ls, heads=NHEAD, eps=LN_EPS),
        grid=(Bb,),
        in_specs=in_specs,
        out_specs=pl.BlockSpec((1, 1, HIDDEN), lambda b: (b, 0, 0)),
        out_shape=jax.ShapeDtypeStruct((Bb, 1, HIDDEN), jnp.float32),
        compiler_params=pltpu.CompilerParams(dimension_semantics=("parallel",)),
    )(*args)
    return out[:, 0, :]                                                # (B, HIDDEN)


def _cnn_stack_kernel(x_ref, *refs, num_layers, batch, seq, ksize, pad_l):
    """Fused stack of same-padding Conv1d+ReLU layers (channels-last).

    x_ref: (B*L, K*Cin) im2col'd layer-1 input (batch flattened into one matmul).
    refs = [w1_mat (K*Cin, C), b1, w2_mat (K*C, C), b2, ..., o_ref (B*L, C)].
    Later layers do in-register im2col (zero concat + static slices) so every layer is a
    single 256-deep matmul and the inter-layer activation never touches HBM.
    """
    o_ref = refs[2 * num_layers]
    pad_r = ksize - 1 - pad_l

    y = jnp.dot(x_ref[...], refs[0][...], preferred_element_type=jnp.float32) + refs[1][...]
    y = jnp.maximum(y, 0.0)                                            # (B*L, C)
    for li in range(1, num_layers):
        w = refs[2 * li]
        bias = refs[2 * li + 1][...]
        c = y.shape[-1]
        y3 = y.reshape(batch, seq, c)
        pieces = []
        if pad_l:
            pieces.append(jnp.zeros((batch, pad_l, c), jnp.float32))
        pieces.append(y3)
        if pad_r:
            pieces.append(jnp.zeros((batch, pad_r, c), jnp.float32))
        ypad = jnp.concatenate(pieces, axis=1)                         # (B, L+K-1, C)
        ycol = jnp.concatenate([ypad[:, kk:kk + seq, :] for kk in range(ksize)],
                               axis=-1)                                # (B, L, K*C)
        y = jnp.dot(ycol.reshape(batch * seq, ksize * c), w[...],
                    preferred_element_type=jnp.float32) + bias
        y = jnp.maximum(y, 0.0)
    o_ref[...] = y.astype(o_ref.dtype)


def cnn_seq_emb(p, x):
    # TODO(synk): CNNSeqEmb source not provided; reconstructed as a stack of same-padding
    # Conv1d + ReLU layers (channels-last), fused into one kernel.
    Bb, Ls, Cin = x.shape
    K = KERNEL
    pad_l, pad_r = (K - 1) // 2, K // 2
    xp = jnp.pad(x, ((0, 0), (pad_l, pad_r), (0, 0)))
    xcol = jnp.concatenate([xp[:, k:k + Ls, :] for k in range(K)], axis=-1)   # (B, L, K*Cin)
    x2 = xcol.reshape(Bb * Ls, K * Cin)
    layers = p["layers"]
    num_layers = len(layers)
    args = [x2]
    for layer in layers:
        args += [layer["w_mat"], layer["b"]]
    cout = layers[-1]["b"].shape[-1]
    out = pl.pallas_call(
        functools.partial(_cnn_stack_kernel, num_layers=num_layers, batch=Bb,
                          seq=Ls, ksize=K, pad_l=pad_l),
        out_shape=jax.ShapeDtypeStruct((Bb * Ls, cout), jnp.float32),
    )(*args)
    return out.reshape(Bb, Ls, cout)


# ----------------------------- plain-JAX building blocks -----------------------
def nyquist_frequency_embedding(x, dim, timesteps):
    # TODO(synk): NyquistFrequencyEmbedding source not provided; reconstructed as
    # log-spaced sinusoidal frequencies between 1/timesteps and the Nyquist freq 1/2.
    half = dim // 2
    freqs = 2.0 * np.pi * np.logspace(np.log10(1.0 / float(timesteps)), np.log10(0.5), half)
    ang = x[..., None].astype(jnp.float32) * jnp.asarray(freqs, dtype=jnp.float32)
    return jnp.concatenate([jnp.sin(ang), jnp.cos(ang)], axis=-1)


# --------------------------------- AddThin -------------------------------------
def compute_emb(params, n, x_n):
    Bb, Ls = x_n.batch_size, x_n.seq_len
    # diffusion time embedding (only B=2 rows): plain JAX -- a Pallas launch here is pure
    # overhead; exact-erf GELU matches PyTorch nn.GELU.
    dif = nyquist_frequency_embedding(n.astype(jnp.float32), EMB_DIM, STEPS)
    dif = jax.nn.gelu(dif @ params["dt1"]["w"] + params["dt1"]["b"], approximate=False)
    dif_time_emb = dif @ params["dt2"]["w"] + params["dt2"]["b"]
    # event time embedding on [time, tau]
    t_in = jnp.stack([x_n.time, x_n.tau], axis=-1)                    # (B, L, 2)
    time_emb = nyquist_frequency_embedding(t_in, EMB_DIM // 2, MAX_TIME).reshape(Bb, Ls, -1)
    # fused CNN sequence embedding, masked
    event_emb = cnn_seq_emb(params["cnn"], time_emb)
    event_emb = event_emb * x_n.mask[..., None]
    # event-level condition embeddings
    conds = [jnp.take(params["event_cond_table"], getattr(x_n, f"condition{i + 1}"), axis=0)
             for i in range(NUM_COND)]
    event_level_cond_emb = jnp.concatenate(conds, axis=-1)            # (B, L, 6*HIDDEN)
    # sequence-level condition embedding (last token of the fused condition transformer)
    seq_level_cond_emb = condition_embedding_model(params["seq_cond"], x_n)
    return dif_time_emb, time_emb, event_emb, event_level_cond_emb, seq_level_cond_emb


def classifier_head(p, dif_time_emb, time_emb, event_emb, cond_emb):
    # TODO(synk): real classifier_model is an external nn.Module (not provided); linear
    # stand-in kept in plain JAX (N=1 output => a Pallas call would be pure launch overhead).
    Bb, Ls, _ = event_emb.shape
    feats = jnp.concatenate(
        [event_emb, time_emb, cond_emb,
         jnp.broadcast_to(dif_time_emb[:, None, :], (Bb, Ls, dif_time_emb.shape[-1]))], axis=-1)
    return (feats.reshape(Bb * Ls, -1) @ p["w"] + p["b"]).reshape(Bb, Ls)


def intensity_log_likelihood(p, event_emb, seq_cond_emb, dif_time_emb, mask):
    # TODO(synk): real intensity_model is an external nn.Module (not provided); linear
    # stand-in kept in plain JAX for the same reason as the classifier head.
    pooled = (event_emb * mask[..., None]).sum(1) / jnp.maximum(mask.sum(1, keepdims=True), 1.0)
    feats = jnp.concatenate([pooled, seq_cond_emb, dif_time_emb], axis=-1)
    return (feats @ p["w"] + p["b"]).reshape(-1)


def with_mask(batch, mask):
    d = dict(vars(batch))
    d["mask"] = mask
    return SimpleNamespace(**d)


def add_thin_forward(params, x_0, rng):
    """AddThin.forward: sample n, noise x_0 -> x_n, compute embeddings, heads."""
    Bb = x_0.batch_size
    k_n, k_thin = jax.random.split(rng)
    n = jax.random.randint(k_n, (Bb,), 0, STEPS)             # diffusion step per sequence
    # noise: thin x_0 with alpha_cumprod[n] (Bernoulli keep per event)
    alpha = params["alpha_cumprod"][n][:, None]              # (B, 1)
    keep = jax.random.bernoulli(k_thin, alpha, (Bb, x_0.seq_len)).astype(jnp.float32)
    x_n = with_mask(x_0, x_0.mask * keep)
    x_0_thin = with_mask(x_0, x_0.mask * (1.0 - keep))
    # TODO(synk): generate_hpp / Batch.add_events (superposing new HPP events onto x_0_kept)
    # is not reproducible without the Batch / generate_hpp sources.
    dif_time_emb, time_emb, event_emb, event_cond_emb, seq_cond_emb = compute_emb(params, n, x_n)
    logits = classifier_head(params["cls_head"], dif_time_emb, time_emb, event_emb, event_cond_emb)
    log_like = intensity_log_likelihood(params["int_head"], event_emb, seq_cond_emb,
                                        dif_time_emb, x_n.mask)
    return logits, log_like, x_n


# ----------------------------- parameter init ----------------------------------
def _dense_init(key, din, dout, scale=0.02):
    kw, kb = jax.random.split(key)
    w = (scale * jax.random.normal(kw, (din, dout))).astype(jnp.float32)
    b = (scale * jax.random.normal(kb, (1, dout))).astype(jnp.float32)
    return w, b


def init_plain_linear(key, din, dout, scale=0.02):
    kw, kb = jax.random.split(key)
    return {"w": (scale * jax.random.normal(kw, (din, dout))).astype(jnp.float32),
            "b": (scale * jax.random.normal(kb, (dout,))).astype(jnp.float32)}


def init_transformer_layer(key, d_model, d_ff, nhead):
    ks = jax.random.split(key, 6)
    dh = d_model // nhead
    scale = 1.0 / math.sqrt(dh)
    wq, bq = _dense_init(ks[0], d_model, d_model)
    wk, bk = _dense_init(ks[1], d_model, d_model)
    wv, bv = _dense_init(ks[2], d_model, d_model)
    wo, bo = _dense_init(ks[3], d_model, d_model)
    wff1, bff1 = _dense_init(ks[4], d_model, d_ff)
    wff2, bff2 = _dense_init(ks[5], d_ff, d_model)
    return {
        # attention score scale folded into W_q / b_q
        "wqkv": jnp.concatenate([wq * scale, wk, wv], axis=1),       # (D, 3D) f32
        "bqkv": jnp.concatenate([bq * scale, bk, bv], axis=1),       # (1, 3D) f32
        "wo": wo, "bo": bo,
        # feed-forward weights stored bf16 (MXU-native operands, f32 accumulation)
        "wff1": wff1.astype(jnp.bfloat16), "bff1": bff1,
        "wff2": wff2.astype(jnp.bfloat16), "bff2": bff2,
        "ln1_g": jnp.ones((1, d_model), jnp.float32), "ln1_b": jnp.zeros((1, d_model), jnp.float32),
        "ln2_g": jnp.ones((1, d_model), jnp.float32), "ln2_b": jnp.zeros((1, d_model), jnp.float32),
    }


def init_cond_emb_model(key):
    ks = jax.random.split(key, 4 + NUM_TF_LAYERS)
    up1_w, up1_b = _dense_init(ks[2], NUM_COND * HIDDEN, HIDDEN)
    up2_w, up2_b = _dense_init(ks[3], HIDDEN, HIDDEN)
    return {
        "tok": (0.02 * jax.random.normal(ks[0], (COND_TOKENS, HIDDEN))).astype(jnp.float32),
        "pos": (0.02 * jax.random.normal(ks[1], (MAX_POS, HIDDEN))).astype(jnp.float32),
        "up1_w": up1_w, "up1_b": up1_b, "up2_w": up2_w, "up2_b": up2_b,
        "layers": [init_transformer_layer(ks[4 + i], HIDDEN, D_FF, NHEAD)
                   for i in range(NUM_TF_LAYERS)],
    }


def init_cnn(key, num_layers, cin, cout, ksize):
    cks = jax.random.split(key, num_layers)
    layers = []
    c = cin
    for i in range(num_layers):
        w = (0.02 * jax.random.normal(cks[i], (ksize, c, cout))).astype(jnp.float32)
        b = jnp.zeros((1, cout), jnp.float32)
        layers.append({"w_mat": w.reshape(ksize * c, cout), "b": b})   # im2col layout
        c = cout
    return {"layers": layers}


def init_params(key):
    ks = jax.random.split(key, 7)
    return {
        "cnn": init_cnn(ks[0], ENCODER_LAYER, HIDDEN, HIDDEN, KERNEL),
        "dt1": init_plain_linear(ks[1], EMB_DIM, EMB_DIM),
        "dt2": init_plain_linear(ks[2], EMB_DIM, EMB_DIM),
        "event_cond_table": (0.02 * jax.random.normal(ks[3], (COND_TOKENS, HIDDEN))).astype(jnp.float32),
        "seq_cond": init_cond_emb_model(ks[4]),
        "cls_head": init_plain_linear(ks[5], HIDDEN + EMB_DIM + NUM_COND * HIDDEN + EMB_DIM, 1),
        "int_head": init_plain_linear(ks[6], HIDDEN + HIDDEN + EMB_DIM, 1),
        "alpha_cumprod": jnp.asarray(ALPHA_CUMPROD),
    }


def make_batch(key):
    ks = jax.random.split(key, 1 + NUM_COND)
    t = jnp.sort(jax.random.uniform(ks[0], (B, L), minval=0.0, maxval=MAX_TIME), axis=1)
    tau = jnp.diff(t, axis=1, prepend=jnp.zeros((B, 1), jnp.float32))
    mask = jnp.ones((B, L), jnp.float32)
    fields = {}
    for i in range(NUM_COND):
        c = jax.random.randint(ks[1 + i], (B, L), 0, COND_TOKENS)
        fields[f"condition{i + 1}"] = c
        fields[f"condition{i + 1}_indicator"] = c
    return SimpleNamespace(time=t, tau=tau, mask=mask, batch_size=B, seq_len=L,
                           tmax=MAX_TIME, **fields)


# ------------------------------------ main --------------------------------------
if __name__ == "__main__":
    root = jax.random.PRNGKey(0)
    pkey, dkey, fkey = jax.random.split(root, 3)
    params = init_params(pkey)
    x_0 = make_batch(dkey)
    logits, log_like, x_n = add_thin_forward(params, x_0, fkey)
    jax.block_until_ready((logits, log_like, x_n.mask, x_n.time))
    assert logits.shape == (B, L) and log_like.shape == (B,)
    assert bool(jnp.all(jnp.isfinite(logits))) and bool(jnp.all(jnp.isfinite(log_like)))
    print("KERNEL_OK")
</pallas_src>

<mosaic_0001>
module attributes {stable_mosaic.version = 11 : i64} {
  func.func @_cnn_stack_kernel(%arg0: memref<16x256xf32, #tpu.memory_space<vmem>>, %arg1: memref<256x64xf32, #tpu.memory_space<vmem>>, %arg2: memref<1x64xf32, #tpu.memory_space<vmem>>, %arg3: memref<256x64xf32, #tpu.memory_space<vmem>>, %arg4: memref<1x64xf32, #tpu.memory_space<vmem>>, %arg5: memref<16x64xf32, #tpu.memory_space<vmem>>) attributes {dimension_semantics = [], scalar_prefetch = 0 : i64, scratch_operands = 0 : i64, tpu.core_type = #tpu.core_type<tc>} {
    %c0 = arith.constant 0 : index
    %c0_0 = arith.constant 0 : index
    %0 = vector.load %arg0[%c0, %c0_0] : memref<16x256xf32, #tpu.memory_space<vmem>>, vector<16x256xf32>
    %c0_1 = arith.constant 0 : index
    %c0_2 = arith.constant 0 : index
    %1 = vector.load %arg1[%c0_1, %c0_2] : memref<256x64xf32, #tpu.memory_space<vmem>>, vector<256x64xf32>
    %cst = arith.constant dense<0.000000e+00> : vector<16x64xf32>
    %2 = tpu.matmul %0, %1, %cst {dimension_numbers = #tpu.dot_dimension_numbers<[1], [0], [0], [1], [0, 0, 1, 1], [], []>} : vector<16x256xf32>, vector<256x64xf32>, vector<16x64xf32> -> vector<16x64xf32>
    %c0_3 = arith.constant 0 : index
    %c0_4 = arith.constant 0 : index
    %3 = vector.load %arg2[%c0_3, %c0_4] : memref<1x64xf32, #tpu.memory_space<vmem>>, vector<1x64xf32>
    %4 = vector.broadcast %3 : vector<1x64xf32> to vector<16x64xf32>
    %5 = arith.addf %2, %4 : vector<16x64xf32>
    %cst_5 = arith.constant 0.000000e+00 : f32
    %6 = vector.broadcast %cst_5 : f32 to vector<16x64xf32>
    %7 = arith.maximumf %5, %6 : vector<16x64xf32>
    %c0_6 = arith.constant 0 : index
    %c0_7 = arith.constant 0 : index
    %8 = vector.load %arg4[%c0_6, %c0_7] : memref<1x64xf32, #tpu.memory_space<vmem>>, vector<1x64xf32>
    %9 = vector.shape_cast %7 : vector<16x64xf32> to vector<2x8x64xf32>
    %cst_8 = arith.constant 0.000000e+00 : f32
    %10 = vector.broadcast %cst_8 : f32 to vector<2x1x64xf32>
    %cst_9 = arith.constant 0.000000e+00 : f32
    %11 = vector.broadcast %cst_9 : f32 to vector<2x2x64xf32>
    %12 = tpu.concatenate %10, %9, %11 in 1 : vector<2x1x64xf32>, vector<2x8x64xf32>, vector<2x2x64xf32> -> vector<2x11x64xf32>
    %13 = vector.extract_strided_slice %12 {offsets = [0, 0, 0], sizes = [2, 8, 64], strides = [1, 1, 1]} : vector<2x11x64xf32> to vector<2x8x64xf32>
    %14 = vector.extract_strided_slice %12 {offsets = [0, 1, 0], sizes = [2, 8, 64], strides = [1, 1, 1]} : vector<2x11x64xf32> to vector<2x8x64xf32>
    %15 = vector.extract_strided_slice %12 {offsets = [0, 2, 0], sizes = [2, 8, 64], strides = [1, 1, 1]} : vector<2x11x64xf32> to vector<2x8x64xf32>
    %16 = vector.extract_strided_slice %12 {offsets = [0, 3, 0], sizes = [2, 8, 64], strides = [1, 1, 1]} : vector<2x11x64xf32> to vector<2x8x64xf32>
    %17 = tpu.concatenate %13, %14, %15, %16 in 2 : vector<2x8x64xf32>, vector<2x8x64xf32>, vector<2x8x64xf32>, vector<2x8x64xf32> -> vector<2x8x256xf32>
    %18 = vector.shape_cast %17 : vector<2x8x256xf32> to vector<16x256xf32>
    %c0_10 = arith.constant 0 : index
    %c0_11 = arith.constant 0 : index
    %19 = vector.load %arg3[%c0_10, %c0_11] : memref<256x64xf32, #tpu.memory_space<vmem>>, vector<256x64xf32>
    %cst_12 = arith.constant dense<0.000000e+00> : vector<16x64xf32>
    %20 = tpu.matmul %18, %19, %cst_12 {dimension_numbers = #tpu.dot_dimension_numbers<[1], [0], [0], [1], [0, 0, 1, 1], [], []>} : vector<16x256xf32>, vector<256x64xf32>, vector<16x64xf32> -> vector<16x64xf32>
    %21 = vector.broadcast %8 : vector<1x64xf32> to vector<16x64xf32>
    %22 = arith.addf %20, %21 : vector<16x64xf32>
    %cst_13 = arith.constant 0.000000e+00 : f32
    %23 = vector.broadcast %cst_13 : f32 to vector<16x64xf32>
    %24 = arith.maximumf %22, %23 : vector<16x64xf32>
    %c0_14 = arith.constant 0 : index
    %c0_15 = arith.constant 0 : index
    %25 = vector.load %arg5[%c0_14, %c0_15] : memref<16x64xf32, #tpu.memory_space<vmem>>, vector<16x64xf32>
    tpu.vector_store %arg5[%c0_14, %c0_15], %24 {strides = array<i32>} : memref<16x64xf32, #tpu.memory_space<vmem>>, vector<16x64xf32>,
    return
  }
}

</mosaic_0001>

<llo_original>
// kernel: tpu_custom_call.1
$region0: #{tpu_custom_call.1}
  #allocation0 [shape = 'u32[]', space=smem, size = 0x4, offset = 0x4, fixed_abs, tag = 'smem constant byte address 0x4 - core index']
  #allocation1 [shape = 'u32[144,128]{1,0:T(1,128)}', space=vmem, size = 0x12000, scoped, tag = 'internal scratch']
  %s0 = inlined_call_operand.vmem [shape: f32[16,256], index: 0, kind: input, shape index: {}]
  %s1 = inlined_call_operand.vmem [shape: f32[256,64], index: 1, kind: input, shape index: {}]
  %s2 = inlined_call_operand.vmem [shape: f32[1,64], index: 2, kind: input, shape index: {}]
  %s3 = inlined_call_operand.vmem [shape: f32[256,64], index: 3, kind: input, shape index: {}]
  %s4 = inlined_call_operand.vmem [shape: f32[1,64], index: 4, kind: input, shape index: {}]
  %s5 = inlined_call_operand.hbm [shape: f32[16,64], index: 5, kind: output, shape index: {}]
  %s6 = sld [smem:[#allocation0]]
  $region30: #{tpu_custom_call.1} parent=0
    _
  %s8 = ssub.s32 1, %s6
  %s9 = scalar_select 0, %s8, %s6
  $region1: #{tpu_custom_call.1} parent=0
    #allocation2 [shape = 'u8[8192]{0}', space=vmem, size = 0x2000, scoped, tag = 'output window, operand 0, single buffered']
    #allocation3 [shape = 's32[1]{0}', space=sflag, size = 0x4, scoped, tag = 'scoped memory for tpu_custom_call.1']
    %10 = vsyncpa [#allocation3], 0
    // Predicated region
    $region2: #{tpu_custom_call.1} parent=1 // pred_check
      _
    $region3: #{tpu_custom_call.1} parent=1 // pred_check_branch
      %12 = sbr.rel (0) target = $region5
    $region4: #{tpu_custom_call.1} parent=1 // pred_region
      _
    $region5: #{tpu_custom_call.1} parent=1 // pred_fallthru
      _
    // Predicated region
    $region6: #{tpu_custom_call.1} parent=1 // pred_check
      _
    $region7: #{tpu_custom_call.1} parent=1 // pred_check_branch
      %14 = sbr.rel (0) target = $region9
    $region8: #{tpu_custom_call.1} parent=1 // pred_region
      _
    $region9: #{tpu_custom_call.1} parent=1 // pred_fallthru
      _
    // Predicated region
    $region10: #{tpu_custom_call.1} parent=1 // pred_check
      _
    $region11: #{tpu_custom_call.1} parent=1 // pred_check_branch
      %16 = sbr.rel (0) target = $region13
    $region12: #{tpu_custom_call.1} parent=1 // pred_region
      _
    $region13: #{tpu_custom_call.1} parent=1 // pred_fallthru
      _
    // Predicated region
    $region14: #{tpu_custom_call.1} parent=1 // pred_check
      _
    $region15: #{tpu_custom_call.1} parent=1 // pred_check_branch
      %18 = sbr.rel (0) target = $region17
    $region16: #{tpu_custom_call.1} parent=1 // pred_region
      _
    $region17: #{tpu_custom_call.1} parent=1 // pred_fallthru
      _
    // Predicated region
    $region18: #{tpu_custom_call.1} parent=1 // pred_check
      _
    $region19: #{tpu_custom_call.1} parent=1 // pred_check_branch
      %20 = sbr.rel (0) target = $region21
    $region20: #{tpu_custom_call.1} parent=1 // pred_region
      _
    $region21: #{tpu_custom_call.1} parent=1 // pred_fallthru
      _
    %v21 = vld [vmem:[%s0] sm:$0xff]
    %v22 = vld [vmem:[%s0 + $0x8] sm:$0xff]
    %v23 = vld [vmem:[%s0 + $0x10] sm:$0xff]
    %v24 = vld [vmem:[%s0 + $0x18] sm:$0xff]
    %v25 = vld [vmem:[%s1] sm:$0xff]
    %v26 = vld [vmem:[%s1 + $0x8] sm:$0xff]
    %v27 = vld [vmem:[%s1 + $0x10] sm:$0xff]
    %v28 = vld [vmem:[%s1 + $0x18] sm:$0xff]
    %v29 = vld [vmem:[%s1 + $0x20] sm:$0xff]
    %v30 = vld [vmem:[%s1 + $0x28] sm:$0xff]
    %v31 = vld [vmem:[%s1 + $0x30] sm:$0xff]
    %v32 = vld [vmem:[%s1 + $0x38] sm:$0xff]
    %v33 = vld [vmem:[%s1 + $0x40] sm:$0xff]
    %v34 = vld [vmem:[%s1 + $0x48] sm:$0xff]
    %v35 = vld [vmem:[%s1 + $0x50] sm:$0xff]
    %v36 = vld [vmem:[%s1 + $0x58] sm:$0xff]
    %v37 = vld [vmem:[%s1 + $0x60] sm:$0xff]
    %v38 = vld [vmem:[%s1 + $0x68] sm:$0xff]
    %v39 = vld [vmem:[%s1 + $0x70] sm:$0xff]
    %v40 = vld [vmem:[%s1 + $0x78] sm:$0xff]
    %v41 = vld [vmem:[%s1 + $0x80] sm:$0xff]
    %v42 = vld [vmem:[%s1 + $0x88] sm:$0xff]
    %v43 = vld [vmem:[%s1 + $0x90] sm:$0xff]
    %v44 = vld [vmem:[%s1 + $0x98] sm:$0xff]
    %v45 = vld [vmem:[%s1 + $0xa0] sm:$0xff]
    %v46 = vld [vmem:[%s1 + $0xa8] sm:$0xff]
    %v47 = vld [vmem:[%s1 + $0xb0] sm:$0xff]
    %v48 = vld [vmem:[%s1 + $0xb8] sm:$0xff]
    %v49 = vld [vmem:[%s1 + $0xc0] sm:$0xff]
    %v50 = vld [vmem:[%s1 + $0xc8] sm:$0xff]
    %v51 = vld [vmem:[%s1 + $0xd0] sm:$0xff]
    %v52 = vld [vmem:[%s1 + $0xd8] sm:$0xff]
    %v53 = vld [vmem:[%s1 + $0xe0] sm:$0xff]
    %v54 = vld [vmem:[%s1 + $0xe8] sm:$0xff]
    %v55 = vld [vmem:[%s1 + $0xf0] sm:$0xff]
    %v56 = vld [vmem:[%s1 + $0xf8] sm:$0xff]
    %v57 = vld [vmem:[%s2] sm:$0x1]
    %v59 = vlaneseq
    %v60 = vshrl.u32 %v59, 7
    %v61 = vsub.s32 0, %v60
    %v62 = vrot.slane %v57, %v61
    %64 = vmatprep.subr.mxu0 0.0
    %65 = vmatpush1.msra.mxu0 %v25
    %66 = vmatprep.subr.mxu0 0.0
    %67 = vmatpush1.msra.mxu0 %v26
    %68 = vmatprep.subr.mxu0 0.0
    %69 = vmatpush1.msra.mxu0 %v27
    %70 = vmatprep.subr.mxu0 0.0
    %71 = vmatpush1.msra.mxu0 %v28
    %72 = vmatprep.subr.mxu0 0.0
    %73 = vmatpush1.msra.mxu0 %v29
    %74 = vmatprep.subr.mxu0 0.0
    %75 = vmatpush1.msra.mxu0 %v30
    %76 = vmatprep.subr.mxu0 0.0
    %77 = vmatpush1.msra.mxu0 %v31
    %78 = vmatprep.subr.mxu0 0.0
    %79 = vmatpush1.msra.mxu0 %v32
    %80 = vmatprep.subr.mxu0 0.0
    %81 = vmatpush1.msra.mxu0 %v33
    %82 = vmatprep.subr.mxu0 0.0
    %83 = vmatpush1.msra.mxu0 %v34
    %84 = vmatprep.subr.mxu0 0.0
    %85 = vmatpush1.msra.mxu0 %v35
    %86 = vmatprep.subr.mxu0 0.0
    %87 = vmatpush1.msra.mxu0 %v36
    %88 = vmatprep.subr.mxu0 0.0
    %89 = vmatpush1.msra.mxu0 %v37
    %90 = vmatprep.subr.mxu0 0.0
    %91 = vmatpush1.msra.mxu0 %v38
    %92 = vmatprep.subr.mxu0 0.0
    %93 = vmatpush1.msra.mxu0 %v39
    %94 = vmatprep.subr.mxu0 0.0
    %95 = vmatpush1.msra.mxu0 %v40
    %96 = vmatprep.subr.mxu0 0.0
    %97 = vmatpush1.msra.mxu0 %v41
    %98 = vmatprep.subr.mxu0 0.0
    %99 = vmatpush1.msra.mxu0 %v42
    %100 = vmatprep.subr.mxu0 0.0
    %101 = vmatpush1.msra.mxu0 %v43
    %102 = vmatprep.subr.mxu0 0.0
    %103 = vmatpush1.msra.mxu0 %v44
    %104 = vmatprep.subr.mxu0 0.0
    %105 = vmatpush1.msra.mxu0 %v45
    %106 = vmatprep.subr.mxu0 0.0
    %107 = vmatpush1.msra.mxu0 %v46
    %108 = vmatprep.subr.mxu0 0.0
    %109 = vmatpush1.msra.mxu0 %v47
    %110 = vmatprep.subr.mxu0 0.0
    %111 = vmatpush1.msra.mxu0 %v48
    %112 = vmatprep.subr.mxu0 0.0
    %113 = vmatpush1.msra.mxu0 %v49
    %114 = vmatprep.subr.mxu0 0.0
    %115 = vmatpush1.msra.mxu0 %v50
    %116 = vmatprep.subr.mxu0 0.0
    %117 = vmatpush1.msra.mxu0 %v51
    %118 = vmatprep.subr.mxu0 0.0
    %119 = vmatpush1.msra.mxu0 %v52
    %120 = vmatprep.subr.mxu0 0.0
    %121 = vmatpush1.msra.mxu0 %v53
    %122 = vmatprep.subr.mxu0 0.0
    %123 = vmatpush1.msra.mxu0 %v54
    %124 = vmatprep.subr.mxu0 0.0
    %125 = vmatpush1.msra.mxu0 %v55
    %126 = vmatprep.subr.mxu0 0.0
    %127 = vmatpush1.msra.mxu0 %v56
    %128 = vmatprep.mubr.f32.mxu0 %v22
    %129 = vmatmul.mubr.f32.gmra.mrb[0].mxu0 %v21
    %v130 = vpop.f32.mrb[0].mxu0
    %v131 = vadd.f32 %v62, %v130
    %v132 = vpop.f32.mrb[0].mxu0
    %133 = vmatprep.mubr.f32.mxu0 %v24
    %134 = vmatmul.mubr.f32.gmra.mrb[0].mxu0 %v23
    %v135 = vpop.f32.mrb[0].mxu0
    %v136 = vadd.f32 %v62, %v135
    %v137 = vpop.f32.mrb[0].mxu0
    %138 = vdwg.mxu0
    %v139 = vmax.f32 %v131, 0.0
    %v140 = vmax.f32 %v136, 0.0
    %v141 = vld [vmem:[%s4] sm:$0x1]
    %v144 = vrot.slane %v139, 7
    %v145 = vrot.slane %v140, 7
    %vm148 = vcmask 1040384
    %v149 = vsel %vm148, 0.0, %v144
    %v150 = vsel %vm148, 0.0, %v145
    %v151 = vsel %vm148, %v144, 0.0
    %v152 = vsel %vm148, %v145, 0.0
    %vm157 = vcmask 1046528
    %v158 = vrot.slane %v149, 1
    %v159 = vrot.slane %v151, 1
    %v160 = vsel %vm157, %v158, %v159
    %v161 = vrot.slane %v150, 1
    %v162 = vrot.slane %v152, 1
    %v163 = vsel %vm157, %v161, %v162
    %164 = vrot.lane.b32.xlu0 %v160, 64
    %v165 = vpop.permute.xlu0 %164
    %166 = vrot.lane.b32.xlu0 %v163, 64
    %v167 = vpop.permute.xlu0 %166
    %vm170 = vcmask 1045504
    %v171 = vrot.slane %v149, 2
    %v172 = vrot.slane %v151, 2
    %v173 = vsel %vm170, %v171, %v172
    %v174 = vrot.slane %v150, 2
    %v175 = vrot.slane %v152, 2
    %v176 = vsel %vm170, %v174, %v175
    %vm179 = vcmask 1044480
    %v180 = vrot.slane %v149, 3
    %v181 = vrot.slane %v151, 3
    %v182 = vsel %vm179, %v180, %v181
    %v183 = vrot.slane %v150, 3
    %v184 = vrot.slane %v152, 3
    %v185 = vsel %vm179, %v183, %v184
    %186 = vrot.lane.b32.xlu0 %v182, 64
    %v187 = vpop.permute.xlu0 %186
    %188 = vrot.lane.b32.xlu0 %v185, 64
    %v189 = vpop.permute.xlu0 %188
    %vm192 = vcmask 523264
    %v193 = vsel %vm192, %v149, %v165
    %v194 = vsel %vm192, %v150, %v167
    %v195 = vsel %vm192, %v173, %v187
    %v196 = vsel %vm192, %v176, %v189
    %v197 = vld [vmem:[%s3] sm:$0xff]
    %v198 = vld [vmem:[%s3 + $0x8] sm:$0xff]
    %v199 = vld [vmem:[%s3 + $0x10] sm:$0xff]
    %v200 = vld [vmem:[%s3 + $0x18] sm:$0xff]
    %v201 = vld [vmem:[%s3 + $0x20] sm:$0xff]
    %v202 = vld [vmem:[%s3 + $0x28] sm:$0xff]
    %v203 = vld [vmem:[%s3 + $0x30] sm:$0xff]
    %v204 = vld [vmem:[%s3 + $0x38] sm:$0xff]
    %v205 = vld [vmem:[%s3 + $0x40] sm:$0xff]
    %v206 = vld [vmem:[%s3 + $0x48] sm:$0xff]
    %v207 = vld [vmem:[%s3 + $0x50] sm:$0xff]
    %v208 = vld [vmem:[%s3 + $0x58] sm:$0xff]
    %v209 = vld [vmem:[%s3 + $0x60] sm:$0xff]
    %v210 = vld [vmem:[%s3 + $0x68] sm:$0xff]
    %v211 = vld [vmem:[%s3 + $0x70] sm:$0xff]
    %v212 = vld [vmem:[%s3 + $0x78] sm:$0xff]
    %v213 = vld [vmem:[%s3 + $0x80] sm:$0xff]
    %v214 = vld [vmem:[%s3 + $0x88] sm:$0xff]
    %v215 = vld [vmem:[%s3 + $0x90] sm:$0xff]
    %v216 = vld [vmem:[%s3 + $0x98] sm:$0xff]
    %v217 = vld [vmem:[%s3 + $0xa0] sm:$0xff]
    %v218 = vld [vmem:[%s3 + $0xa8] sm:$0xff]
    %v219 = vld [vmem:[%s3 + $0xb0] sm:$0xff]
    %v220 = vld [vmem:[%s3 + $0xb8] sm:$0xff]
    %v221 = vld [vmem:[%s3 + $0xc0] sm:$0xff]
    %v222 = vld [vmem:[%s3 + $0xc8] sm:$0xff]
    %v223 = vld [vmem:[%s3 + $0xd0] sm:$0xff]
    %v224 = vld [vmem:[%s3 + $0xd8] sm:$0xff]
    %v225 = vld [vmem:[%s3 + $0xe0] sm:$0xff]
    %v226 = vld [vmem:[%s3 + $0xe8] sm:$0xff]
    %v227 = vld [vmem:[%s3 + $0xf0] sm:$0xff]
    %v228 = vld [vmem:[%s3 + $0xf8] sm:$0xff]
    %v230 = vlaneseq
    %v231 = vshrl.u32 %v230, 7
    %v232 = vsub.s32 0, %v231
    %v233 = vrot.slane %v141, %v232
    %235 = vmatprep.subr.mxu0 0.0
    %236 = vmatpush1.msra.mxu0 %v197
    %237 = vmatprep.subr.mxu0 0.0
    %238 = vmatpush1.msra.mxu0 %v198
    %239 = vmatprep.subr.mxu0 0.0
    %240 = vmatpush1.msra.mxu0 %v199
    %241 = vmatprep.subr.mxu0 0.0
    %242 = vmatpush1.msra.mxu0 %v200
    %243 = vmatprep.subr.mxu0 0.0
    %244 = vmatpush1.msra.mxu0 %v201
    %245 = vmatprep.subr.mxu0 0.0
    %246 = vmatpush1.msra.mxu0 %v202
    %247 = vmatprep.subr.mxu0 0.0
    %248 = vmatpush1.msra.mxu0 %v203
    %249 = vmatprep.subr.mxu0 0.0
    %250 = vmatpush1.msra.mxu0 %v204
    %251 = vmatprep.subr.mxu0 0.0
    %252 = vmatpush1.msra.mxu0 %v205
    %253 = vmatprep.subr.mxu0 0.0
    %254 = vmatpush1.msra.mxu0 %v206
    %255 = vmatprep.subr.mxu0 0.0
    %256 = vmatpush1.msra.mxu0 %v207
    %257 = vmatprep.subr.mxu0 0.0
    %258 = vmatpush1.msra.mxu0 %v208
    %259 = vmatprep.subr.mxu0 0.0
    %260 = vmatpush1.msra.mxu0 %v209
    %261 = vmatprep.subr.mxu0 0.0
    %262 = vmatpush1.msra.mxu0 %v210
    %263 = vmatprep.subr.mxu0 0.0
    %264 = vmatpush1.msra.mxu0 %v211
    %265 = vmatprep.subr.mxu0 0.0
    %266 = vmatpush1.msra.mxu0 %v212
    %267 = vmatprep.subr.mxu0 0.0
    %268 = vmatpush1.msra.mxu0 %v213
    %269 = vmatprep.subr.mxu0 0.0
    %270 = vmatpush1.msra.mxu0 %v214
    %271 = vmatprep.subr.mxu0 0.0
    %272 = vmatpush1.msra.mxu0 %v215
    %273 = vmatprep.subr.mxu0 0.0
    %274 = vmatpush1.msra.mxu0 %v216
    %275 = vmatprep.subr.mxu0 0.0
    %276 = vmatpush1.msra.mxu0 %v217
    %277 = vmatprep.subr.mxu0 0.0
    %278 = vmatpush1.msra.mxu0 %v218
    %279 = vmatprep.subr.mxu0 0.0
    %280 = vmatpush1.msra.mxu0 %v219
    %281 = vmatprep.subr.mxu0 0.0
    %282 = vmatpush1.msra.mxu0 %v220
    %283 = vmatprep.subr.mxu0 0.0
    %284 = vmatpush1.msra.mxu0 %v221
    %285 = vmatprep.subr.mxu0 0.0
    %286 = vmatpush1.msra.mxu0 %v222
    %287 = vmatprep.subr.mxu0 0.0
    %288 = vmatpush1.msra.mxu0 %v223
    %289 = vmatprep.subr.mxu0 0.0
    %290 = vmatpush1.msra.mxu0 %v224
    %291 = vmatprep.subr.mxu0 0.0
    %292 = vmatpush1.msra.mxu0 %v225
    %293 = vmatprep.subr.mxu0 0.0
    %294 = vmatpush1.msra.mxu0 %v226
    %295 = vmatprep.subr.mxu0 0.0
    %296 = vmatpush1.msra.mxu0 %v227
    %297 = vmatprep.subr.mxu0 0.0
    %298 = vmatpush1.msra.mxu0 %v228
    %299 = vmatprep.mubr.f32.mxu0 %v195
    %300 = vmatmul.mubr.f32.gmra.mrb[0].mxu0 %v193
    %v301 = vpop.f32.mrb[0].mxu0
    %v302 = vadd.f32 %v233, %v301
    %v303 = vpop.f32.mrb[0].mxu0
    %304 = vmatprep.mubr.f32.mxu0 %v196
    %305 = vmatmul.mubr.f32.gmra.mrb[0].mxu0 %v194
    %v306 = vpop.f32.mrb[0].mxu0
    %v307 = vadd.f32 %v233, %v306
    %v308 = vpop.f32.mrb[0].mxu0
    %309 = vdwg.mxu0
    %v310 = vmax.f32 %v302, 0.0
    %v311 = vmax.f32 %v307, 0.0
    %312 = vst.msk [vmem:[#allocation2] sm:$0xff] %vm192, %v310
    %313 = vst.msk [vmem:[#allocation2 + $0x8] sm:$0xff] %vm192, %v311
    // Predicated region
    $region22: #{tpu_custom_call.1} parent=1 // pred_check
      _
    $region23: #{tpu_custom_call.1} parent=1 // pred_check_branch
      %315 = sbr.rel (0) target = $region25
    $region24: #{tpu_custom_call.1} parent=1 // pred_region
      %s317 = ssub.s32 256, 256
      %318 = vsyncadd [#allocation3], %s317
      %s319 = sshll.u32 [#allocation2], 4
      %s320 = int_to_ptr.vmem [resolvable:$true] %s319
      %325 = dma.vmem_to_hbm [thread:$0]  %s320, 256, %s5, [#allocation3], 128, 128, 8
    $region25: #{tpu_custom_call.1} parent=1 // pred_fallthru
      _
    // Predicated region
    $region26: #{tpu_custom_call.1} parent=1 // pred_check
      _
    $region27: #{tpu_custom_call.1} parent=1 // pred_check_branch
      %327 = sbr.rel (0) target = $region29
    $region28: #{tpu_custom_call.1} parent=1 // pred_region
      %328 = dma.done [#allocation3], 256
    $region29: #{tpu_custom_call.1} parent=1 // pred_fallthru
      _
    %329 = vsyncpa [#allocation3], 1

</llo_original>
